<compile_context>
chip_gen: v7x
topology: tpu7x:2x2x1
jax: 0.10.0
libtpu: 0.0.40
codegen_flags: <defaults>
</compile_context>

<pallas_src>
import functools

import jax
import jax.numpy as jnp
import numpy as np
from jax.experimental import pallas as pl
from jax.experimental.pallas import tpu as pltpu


def cnn_fused_kernel(patchesT_ref, wT_ref, b_conv_ref, wm_ref, mask_ref, g_ref,
                     b_fc_ref, o_ref, *, n_pool_offsets, batch):
    # patchesT_ref: (KKC, n_pool_offsets * N * P)   im2col, columns ordered (d, n, p)
    # wT_ref:       (Cout, KKC)
    # b_conv_ref:   (Cout, 1)
    # wm_ref:       (P, Cout * n_classes)   Wm[p, c*ncls + k] = w_fc[k, c*P + p]
    # mask_ref:     (Cout, Cout * n_classes) mask[c, c'*ncls + k] = (c' == c)
    # g_ref:        (Cout * n_classes, n_classes) G[c*ncls + k, k'] = (k == k')
    # b_fc_ref:     (1, n_classes)
    # o_ref:        (N, n_classes)

    # ---- conv as one MXU matmul: (Cout, KKC) @ (KKC, 4*NP) -> (Cout, 4*NP) ----
    zT = jnp.dot(wT_ref[...], patchesT_ref[...],
                 preferred_element_type=jnp.float32)

    P = wm_ref.shape[0]               # H2*W2
    NP = batch * P                    # N*H2*W2

    # ---- 2x2 maxpool == max over the pool-offset column blocks (static lane slices) ----
    pooledT = zT[:, 0:NP]
    for d in range(1, n_pool_offsets):
        pooledT = jnp.maximum(pooledT, zT[:, d * NP:(d + 1) * NP])

    # bias + ReLU (bias is constant across pool offsets; ReLU commutes with max)
    pooledT = jnp.maximum(pooledT + b_conv_ref[...], 0.0)   # (Cout, NP), lane-dense

    # ---- fused FC: scores[n,k] = sum_{c,p} pooledT[c, n*P+p] * w_fc[k, c*P+p] ----
    wm = wm_ref[...]
    mask = mask_ref[...]
    g = g_ref[...]
    rows = []
    for n in range(batch):
        xnT = pooledT[:, n * P:(n + 1) * P]                       # (Cout, P)
        y = jnp.dot(xnT, wm, preferred_element_type=jnp.float32)  # (Cout, Cout*ncls)
        # keep only the c' == c block of each row, then sum over c
        v = jnp.sum(y * mask, axis=0, keepdims=True)              # (1, Cout*ncls)
        rows.append(jnp.dot(v, g, preferred_element_type=jnp.float32))  # (1, ncls)
    o_ref[...] = jnp.concatenate(rows, axis=0) + b_fc_ref[...]


def cnn_forward(x_nchw, w_conv, b_conv, w_fc, b_fc, *, pad=1, pool=2):
    N, Cin, H, W = x_nchw.shape
    K = w_conv.shape[0]
    Cout = w_conv.shape[3]
    n_classes = w_fc.shape[0]
    H_out = H + 2 * pad - K + 1
    W_out = W + 2 * pad - K + 1
    H2, W2 = H_out // pool, W_out // pool
    P = H2 * W2
    NP = N * P
    KKC = K * K * Cin

    # glue: NCHW -> NHWC, pad, im2col (one slab per pool offset), transposed
    x_nhwc = jnp.transpose(x_nchw, (0, 2, 3, 1))
    x_pad = jnp.pad(x_nhwc, ((0, 0), (pad, pad), (pad, pad), (0, 0)))

    slabs = []
    for dh in range(pool):
        for dw in range(pool):
            cols = []
            for kh in range(K):
                for kw in range(K):
                    cols.append(
                        x_pad[:, dh + kh: dh + kh + pool * H2: pool,
                                 dw + kw: dw + kw + pool * W2: pool, :]
                    )
            p = jnp.concatenate(cols, axis=-1)        # (N, H2, W2, KKC)
            slabs.append(p.reshape(NP, KKC))          # rows (n, h2, w2)
    patches = jnp.concatenate(slabs, axis=0)          # (pool*pool*NP, KKC), rows (d, n, p)
    patchesT = patches.T                              # (KKC, pool*pool*NP), cols (d, n, p)

    wT = w_conv.reshape(KKC, Cout).T                  # (Cout, KKC), row order (kh, kw, ci)
    b_conv2 = b_conv.reshape(Cout, 1)

    # FC weight in PyTorch NCHW-flatten order: flat index = c*P + p
    wm = (w_fc.reshape(n_classes, Cout, P)            # (k, c, p)
              .transpose(2, 1, 0)                     # (p, c, k)
              .reshape(P, Cout * n_classes))          # (P, Cout*ncls)
    # diagonal-select mask and fold matrix (tiny constants, folded under jit)
    mask = jnp.repeat(jnp.eye(Cout, dtype=jnp.float32), n_classes, axis=1)  # (Cout, Cout*ncls)
    g = jnp.tile(jnp.eye(n_classes, dtype=jnp.float32), (Cout, 1))          # (Cout*ncls, ncls)
    b_fc2 = b_fc.reshape(1, n_classes)

    kernel = functools.partial(cnn_fused_kernel,
                               n_pool_offsets=pool * pool, batch=N)

    scores = pl.pallas_call(
        kernel,
        out_shape=jax.ShapeDtypeStruct((N, n_classes), jnp.float32),
        in_specs=[pl.BlockSpec(memory_space=pltpu.MemorySpace.VMEM)] * 7,
        out_specs=pl.BlockSpec(memory_space=pltpu.MemorySpace.VMEM),
    )(patchesT, wT, b_conv2, wm, mask, g, b_fc2)
    return scores


def reference_forward(x_nchw, w_conv, b_conv, w_fc, b_fc, *, pad=1, pool=2):
    # pure-JAX reference mirroring the PyTorch module exactly
    x_nhwc = jnp.transpose(x_nchw, (0, 2, 3, 1))
    conv = jax.lax.conv_general_dilated(
        x_nhwc, w_conv, window_strides=(1, 1),
        padding=((pad, pad), (pad, pad)),
        dimension_numbers=("NHWC", "HWIO", "NHWC"),
        precision=jax.lax.Precision.HIGHEST,
    ) + b_conv
    r = jnp.maximum(conv, 0.0)
    N, Ho, Wo, C = r.shape
    H2, W2 = Ho // pool, Wo // pool
    p = r.reshape(N, H2, pool, W2, pool, C).max(axis=(2, 4))
    flat = jnp.transpose(p, (0, 3, 1, 2)).reshape(N, -1)   # NCHW flatten
    return jnp.dot(flat, w_fc.T, precision=jax.lax.Precision.HIGHEST) + b_fc


if __name__ == "__main__":
    # CNN(im_size=(4, 16, 16), hidden_dim=8, kernel_size=3, n_classes=10), batch=2
    N, Cin, H, W = 2, 4, 16, 16
    hidden_dim, K, n_classes = 8, 3, 10
    pad, pool = 1, 2
    H_out = H + 2 * pad - K + 1
    W_out = W + 2 * pad - K + 1
    F = (H_out // pool) * (W_out // pool) * hidden_dim

    key = jax.random.PRNGKey(0)
    k1, k2, k3, k4, k5 = jax.random.split(key, 5)
    w_conv = 0.1 * jax.random.normal(k1, (K, K, Cin, hidden_dim), jnp.float32)
    b_conv = 0.1 * jax.random.normal(k2, (hidden_dim,), jnp.float32)
    w_fc = 0.05 * jax.random.normal(k3, (n_classes, F), jnp.float32)
    b_fc = 0.05 * jax.random.normal(k4, (n_classes,), jnp.float32)
    x = jax.random.normal(k5, (N, Cin, H, W), jnp.float32)

    fwd = jax.jit(functools.partial(cnn_forward, pad=pad, pool=pool))
    scores = jax.block_until_ready(fwd(x, w_conv, b_conv, w_fc, b_fc))

    ref = reference_forward(x, w_conv, b_conv, w_fc, b_fc, pad=pad, pool=pool)
    assert scores.shape == (N, n_classes)
    assert np.allclose(np.asarray(scores), np.asarray(ref), rtol=1e-2, atol=1e-2), (
        np.max(np.abs(np.asarray(scores) - np.asarray(ref)))
    )
    print("KERNEL_OK")
</pallas_src>

<mosaic_0001>
module attributes {stable_mosaic.version = 11 : i64} {
  func.func @cnn_fused_kernel(%arg0: memref<36x512xf32, #tpu.memory_space<vmem>>, %arg1: memref<8x36xf32, #tpu.memory_space<vmem>>, %arg2: memref<8x1xf32, #tpu.memory_space<vmem>>, %arg3: memref<64x80xf32, #tpu.memory_space<vmem>>, %arg4: memref<8x80xf32, #tpu.memory_space<vmem>>, %arg5: memref<80x10xf32, #tpu.memory_space<vmem>>, %arg6: memref<1x10xf32, #tpu.memory_space<vmem>>, %arg7: memref<2x10xf32, #tpu.memory_space<vmem>>) attributes {dimension_semantics = [], scalar_prefetch = 0 : i64, scratch_operands = 0 : i64, tpu.core_type = #tpu.core_type<tc>} {
    %c0 = arith.constant 0 : index
    %c0_0 = arith.constant 0 : index
    %0 = vector.load %arg1[%c0, %c0_0] : memref<8x36xf32, #tpu.memory_space<vmem>>, vector<8x36xf32>
    %c0_1 = arith.constant 0 : index
    %c0_2 = arith.constant 0 : index
    %1 = vector.load %arg0[%c0_1, %c0_2] : memref<36x512xf32, #tpu.memory_space<vmem>>, vector<36x512xf32>
    %cst = arith.constant dense<0.000000e+00> : vector<8x512xf32>
    %2 = tpu.matmul %0, %1, %cst {dimension_numbers = #tpu.dot_dimension_numbers<[1], [0], [0], [1], [0, 0, 1, 1], [], []>} : vector<8x36xf32>, vector<36x512xf32>, vector<8x512xf32> -> vector<8x512xf32>
    %3 = vector.extract_strided_slice %2 {offsets = [0, 0], sizes = [8, 128], strides = [1, 1]} : vector<8x512xf32> to vector<8x128xf32>
    %4 = vector.extract_strided_slice %2 {offsets = [0, 128], sizes = [8, 128], strides = [1, 1]} : vector<8x512xf32> to vector<8x128xf32>
    %5 = arith.maximumf %3, %4 : vector<8x128xf32>
    %6 = vector.extract_strided_slice %2 {offsets = [0, 256], sizes = [8, 128], strides = [1, 1]} : vector<8x512xf32> to vector<8x128xf32>
    %7 = arith.maximumf %5, %6 : vector<8x128xf32>
    %8 = vector.extract_strided_slice %2 {offsets = [0, 384], sizes = [8, 128], strides = [1, 1]} : vector<8x512xf32> to vector<8x128xf32>
    %9 = arith.maximumf %7, %8 : vector<8x128xf32>
    %c0_3 = arith.constant 0 : index
    %c0_4 = arith.constant 0 : index
    %10 = vector.load %arg2[%c0_3, %c0_4] : memref<8x1xf32, #tpu.memory_space<vmem>>, vector<8x1xf32>
    %11 = vector.broadcast %10 : vector<8x1xf32> to vector<8x128xf32>
    %12 = arith.addf %9, %11 : vector<8x128xf32>
    %cst_5 = arith.constant 0.000000e+00 : f32
    %13 = vector.broadcast %cst_5 : f32 to vector<8x128xf32>
    %14 = arith.maximumf %12, %13 : vector<8x128xf32>
    %c0_6 = arith.constant 0 : index
    %c0_7 = arith.constant 0 : index
    %15 = vector.load %arg3[%c0_6, %c0_7] : memref<64x80xf32, #tpu.memory_space<vmem>>, vector<64x80xf32>
    %c0_8 = arith.constant 0 : index
    %c0_9 = arith.constant 0 : index
    %16 = vector.load %arg4[%c0_8, %c0_9] : memref<8x80xf32, #tpu.memory_space<vmem>>, vector<8x80xf32>
    %c0_10 = arith.constant 0 : index
    %c0_11 = arith.constant 0 : index
    %17 = vector.load %arg5[%c0_10, %c0_11] : memref<80x10xf32, #tpu.memory_space<vmem>>, vector<80x10xf32>
    %18 = vector.extract_strided_slice %14 {offsets = [0, 0], sizes = [8, 64], strides = [1, 1]} : vector<8x128xf32> to vector<8x64xf32>
    %cst_12 = arith.constant dense<0.000000e+00> : vector<8x80xf32>
    %19 = tpu.matmul %18, %15, %cst_12 {dimension_numbers = #tpu.dot_dimension_numbers<[1], [0], [0], [1], [0, 0, 1, 1], [], []>} : vector<8x64xf32>, vector<64x80xf32>, vector<8x80xf32> -> vector<8x80xf32>
    %20 = arith.mulf %19, %16 : vector<8x80xf32>
    %cst_13 = arith.constant dense<0.000000e+00> : vector<80xf32>
    %21 = vector.multi_reduction <add>, %20, %cst_13 [0] : vector<8x80xf32> to vector<80xf32>
    %22 = vector.shape_cast %21 : vector<80xf32> to vector<1x80xf32>
    %cst_14 = arith.constant dense<0.000000e+00> : vector<1x10xf32>
    %23 = tpu.matmul %22, %17, %cst_14 {dimension_numbers = #tpu.dot_dimension_numbers<[1], [0], [0], [1], [0, 0, 1, 1], [], []>} : vector<1x80xf32>, vector<80x10xf32>, vector<1x10xf32> -> vector<1x10xf32>
    %24 = vector.extract_strided_slice %14 {offsets = [0, 64], sizes = [8, 64], strides = [1, 1]} : vector<8x128xf32> to vector<8x64xf32>
    %cst_15 = arith.constant dense<0.000000e+00> : vector<8x80xf32>
    %25 = tpu.matmul %24, %15, %cst_15 {dimension_numbers = #tpu.dot_dimension_numbers<[1], [0], [0], [1], [0, 0, 1, 1], [], []>} : vector<8x64xf32>, vector<64x80xf32>, vector<8x80xf32> -> vector<8x80xf32>
    %26 = arith.mulf %25, %16 : vector<8x80xf32>
    %cst_16 = arith.constant dense<0.000000e+00> : vector<80xf32>
    %27 = vector.multi_reduction <add>, %26, %cst_16 [0] : vector<8x80xf32> to vector<80xf32>
    %28 = vector.shape_cast %27 : vector<80xf32> to vector<1x80xf32>
    %cst_17 = arith.constant dense<0.000000e+00> : vector<1x10xf32>
    %29 = tpu.matmul %28, %17, %cst_17 {dimension_numbers = #tpu.dot_dimension_numbers<[1], [0], [0], [1], [0, 0, 1, 1], [], []>} : vector<1x80xf32>, vector<80x10xf32>, vector<1x10xf32> -> vector<1x10xf32>
    %30 = tpu.concatenate %23, %29 in 0 : vector<1x10xf32>, vector<1x10xf32> -> vector<2x10xf32>
    %c0_18 = arith.constant 0 : index
    %c0_19 = arith.constant 0 : index
    %31 = vector.load %arg6[%c0_18, %c0_19] : memref<1x10xf32, #tpu.memory_space<vmem>>, vector<1x10xf32>
    %32 = vector.broadcast %31 : vector<1x10xf32> to vector<2x10xf32>
    %33 = arith.addf %30, %32 : vector<2x10xf32>
    %c0_20 = arith.constant 0 : index
    %c0_21 = arith.constant 0 : index
    %34 = vector.load %arg7[%c0_20, %c0_21] : memref<2x10xf32, #tpu.memory_space<vmem>>, vector<2x10xf32>
    tpu.vector_store %arg7[%c0_20, %c0_21], %33 {strides = array<i32>} : memref<2x10xf32, #tpu.memory_space<vmem>>, vector<2x10xf32>,
    return
  }
}

</mosaic_0001>

<llo_original>
// kernel: tile.9
$region0: #{tile.9}
  %s0 = inlined_call_operand.vmem [shape: f32[8,10,10], index: 0, kind: input, shape index: {}]
  %s1 = inlined_call_operand.vmem [shape: f32[80,10], index: 1, kind: output, shape index: {}]
  %v2 = vld [vmem:[%s0] ss:$8 sm:$0xf]
  %v3 = vld [vmem:[%s0] ss:$8 sm:$0xf0]
  %vm4 = vcmask 1047556
  %v5 = vsel %vm4, %v3, %v2
  %vm6 = vcmask 80896
  %7 = vst.msk [vmem:[%s1] sm:$0xff] %vm6, %v5
  %s8 = scalar_lea.vmem %s0, 64
  %s9 = smov 3
  %v10 = vld [vmem:[%s8] ss:$8 sm:%s9]
  %vm11 = vcmask 80896
  %s12 = scalar_lea.vmem %s1, 8
  %13 = vst.msk [vmem:[%s12] sm:$0x3] %vm11, %v10
  %s14 = scalar_lea.vmem %s0, 7
  %v15 = vld [vmem:[%s14] ss:$8 sm:$0xf]
  %s16 = scalar_lea.vmem %s0, 7
  %v17 = vld [vmem:[%s16] ss:$8 sm:$0xf0]
  %vm18 = vcmask 1047556
  %v19 = vsel %vm18, %v17, %v15
  %20 = vrot.lane.b32.xlu0 %v19, 70
  %v21 = vpop.permute.xlu0 %20
  %vm22 = vcmask 654896
  %23 = vst.msk [vmem:[%s1] sm:$0xff] %vm22, %v21
  %s24 = scalar_lea.vmem %s0, 71
  %s25 = smov 3
  %v26 = vld [vmem:[%s24] ss:$8 sm:%s25]
  %27 = vrot.lane.b32.xlu0 %v26, 70
  %v28 = vpop.permute.xlu0 %27
  %vm29 = vcmask 654896
  %s30 = scalar_lea.vmem %s1, 8
  %31 = vst.msk [vmem:[%s30] sm:$0x3] %vm29, %v28
  %s32 = scalar_lea.vmem %s0, 6
  %v33 = vld [vmem:[%s32] ss:$8 sm:$0xf]
  %s34 = scalar_lea.vmem %s0, 6
  %v35 = vld [vmem:[%s34] ss:$8 sm:$0xf0]
  %vm36 = vcmask 1047556
  %v37 = vsel %vm36, %v35, %v33
  %38 = vrot.lane.b32.xlu0 %v37, 60
  %v39 = vpop.permute.xlu0 %38
  %vm40 = vcmask 572896
  %41 = vst.msk [vmem:[%s1] sm:$0xff] %vm40, %v39
  %s42 = scalar_lea.vmem %s0, 70
  %s43 = smov 3
  %v44 = vld [vmem:[%s42] ss:$8 sm:%s43]
  %45 = vrot.lane.b32.xlu0 %v44, 60
  %v46 = vpop.permute.xlu0 %45
  %vm47 = vcmask 572896
  %s48 = scalar_lea.vmem %s1, 8
  %49 = vst.msk [vmem:[%s48] sm:$0x3] %vm47, %v46
  %s50 = scalar_lea.vmem %s0, 5
  %v51 = vld [vmem:[%s50] ss:$8 sm:$0xf]
  %s52 = scalar_lea.vmem %s0, 5
  %v53 = vld [vmem:[%s52] ss:$8 sm:$0xf0]
  %vm54 = vcmask 1047556
  %v55 = vsel %vm54, %v53, %v51
  %56 = vrot.lane.b32.xlu0 %v55, 50
  %v57 = vpop.permute.xlu0 %56
  %vm58 = vcmask 490896
  %59 = vst.msk [vmem:[%s1] sm:$0xff] %vm58, %v57
  %s60 = scalar_lea.vmem %s0, 69
  %s61 = smov 3
  %v62 = vld [vmem:[%s60] ss:$8 sm:%s61]
  %63 = vrot.lane.b32.xlu0 %v62, 50
  %v64 = vpop.permute.xlu0 %63
  %vm65 = vcmask 490896
  %s66 = scalar_lea.vmem %s1, 8
  %67 = vst.msk [vmem:[%s66] sm:$0x3] %vm65, %v64
  %s68 = scalar_lea.vmem %s0, 4
  %v69 = vld [vmem:[%s68] ss:$8 sm:$0xf]
  %s70 = scalar_lea.vmem %s0, 4
  %v71 = vld [vmem:[%s70] ss:$8 sm:$0xf0]
  %vm72 = vcmask 1047556
  %v73 = vsel %vm72, %v71, %v69
  %74 = vrot.lane.b32.xlu0 %v73, 40
  %v75 = vpop.permute.xlu0 %74
  %vm76 = vcmask 408896
  %77 = vst.msk [vmem:[%s1] sm:$0xff] %vm76, %v75
  %s78 = scalar_lea.vmem %s0, 68
  %s79 = smov 3
  %v80 = vld [vmem:[%s78] ss:$8 sm:%s79]
  %81 = vrot.lane.b32.xlu0 %v80, 40
  %v82 = vpop.permute.xlu0 %81
  %vm83 = vcmask 408896
  %s84 = scalar_lea.vmem %s1, 8
  %85 = vst.msk [vmem:[%s84] sm:$0x3] %vm83, %v82
  %s86 = scalar_lea.vmem %s0, 3
  %v87 = vld [vmem:[%s86] ss:$8 sm:$0xf]
  %s88 = scalar_lea.vmem %s0, 3
  %v89 = vld [vmem:[%s88] ss:$8 sm:$0xf0]
  %vm90 = vcmask 1047556
  %v91 = vsel %vm90, %v89, %v87
  %92 = vrot.lane.b32.xlu0 %v91, 30
  %v93 = vpop.permute.xlu0 %92
  %vm94 = vcmask 326896
  %95 = vst.msk [vmem:[%s1] sm:$0xff] %vm94, %v93
  %s96 = scalar_lea.vmem %s0, 67
  %s97 = smov 3
  %v98 = vld [vmem:[%s96] ss:$8 sm:%s97]
  %99 = vrot.lane.b32.xlu0 %v98, 30
  %v100 = vpop.permute.xlu0 %99
  %vm101 = vcmask 326896
  %s102 = scalar_lea.vmem %s1, 8
  %103 = vst.msk [vmem:[%s102] sm:$0x3] %vm101, %v100
  %s104 = scalar_lea.vmem %s0, 2
  %v105 = vld [vmem:[%s104] ss:$8 sm:$0xf]
  %s106 = scalar_lea.vmem %s0, 2
  %v107 = vld [vmem:[%s106] ss:$8 sm:$0xf0]
  %vm108 = vcmask 1047556
  %v109 = vsel %vm108, %v107, %v105
  %110 = vrot.lane.b32.xlu0 %v109, 20
  %v111 = vpop.permute.xlu0 %110
  %vm112 = vcmask 244896
  %113 = vst.msk [vmem:[%s1] sm:$0xff] %vm112, %v111
  %s114 = scalar_lea.vmem %s0, 66
  %s115 = smov 3
  %v116 = vld [vmem:[%s114] ss:$8 sm:%s115]
  %117 = vrot.lane.b32.xlu0 %v116, 20
  %v118 = vpop.permute.xlu0 %117
  %vm119 = vcmask 244896
  %s120 = scalar_lea.vmem %s1, 8
  %121 = vst.msk [vmem:[%s120] sm:$0x3] %vm119, %v118
  %s122 = scalar_lea.vmem %s0, 1
  %v123 = vld [vmem:[%s122] ss:$8 sm:$0xf]
  %s124 = scalar_lea.vmem %s0, 1
  %v125 = vld [vmem:[%s124] ss:$8 sm:$0xf0]
  %vm126 = vcmask 1047556
  %v127 = vsel %vm126, %v125, %v123
  %128 = vrot.lane.b32.xlu0 %v127, 10
  %v129 = vpop.permute.xlu0 %128
  %vm130 = vcmask 162896
  %131 = vst.msk [vmem:[%s1] sm:$0xff] %vm130, %v129
  %s132 = scalar_lea.vmem %s0, 65
  %s133 = smov 3
  %v134 = vld [vmem:[%s132] ss:$8 sm:%s133]
  %135 = vrot.lane.b32.xlu0 %v134, 10
  %v136 = vpop.permute.xlu0 %135
  %vm137 = vcmask 162896
  %s138 = scalar_lea.vmem %s1, 8
  %139 = vst.msk [vmem:[%s138] sm:$0x3] %vm137, %v136

// kernel: cnn_forward.1
$region0: #{cnn_forward.1}
  #allocation0 [shape = 'u32[]', space=smem, size = 0x4, offset = 0x4, fixed_abs, tag = 'smem constant byte address 0x4 - core index']
  #allocation1 [shape = 'u32[144,128]{1,0:T(1,128)}', space=vmem, size = 0x12000, scoped, tag = 'internal scratch']
  %s0 = inlined_call_operand.vmem [shape: f32[36,512], index: 0, kind: input, shape index: {}]
  %s1 = inlined_call_operand.vmem [shape: f32[8,36], index: 1, kind: input, shape index: {}]
  %s2 = inlined_call_operand.vmem [shape: f32[8,1], index: 2, kind: input, shape index: {}]
  %s3 = inlined_call_operand.vmem [shape: f32[64,80], index: 3, kind: input, shape index: {}]
  %s4 = inlined_call_operand.vmem [shape: f32[8,80], index: 4, kind: input, shape index: {}]
  %s5 = inlined_call_operand.vmem [shape: f32[80,10], index: 5, kind: input, shape index: {}]
  %s6 = inlined_call_operand.vmem [shape: f32[1,10], index: 6, kind: input, shape index: {}]
  %s7 = inlined_call_operand.hbm [shape: f32[2,10], index: 7, kind: output, shape index: {}]
  %s8 = sld [smem:[#allocation0]]
  $region38: #{cnn_forward.1} parent=0
    _
  %s10 = ssub.s32 1, %s8
  %s11 = scalar_select 0, %s10, %s8
  $region1: #{cnn_forward.1} parent=0
    #allocation2 [shape = 'u8[1024]{0}', space=vmem, size = 0x400, scoped, tag = 'output window, operand 0, single buffered']
    #allocation3 [shape = 's32[1]{0}', space=sflag, size = 0x4, scoped, tag = 'scoped memory for cnn_forward.1']
    %12 = vsyncpa [#allocation3], 0
    // Predicated region
    $region2: #{cnn_forward.1} parent=1 // pred_check
      _
    $region3: #{cnn_forward.1} parent=1 // pred_check_branch
      %14 = sbr.rel (0) target = $region5
    $region4: #{cnn_forward.1} parent=1 // pred_region
      _
    $region5: #{cnn_forward.1} parent=1 // pred_fallthru
      _
    // Predicated region
    $region6: #{cnn_forward.1} parent=1 // pred_check
      _
    $region7: #{cnn_forward.1} parent=1 // pred_check_branch
      %16 = sbr.rel (0) target = $region9
    $region8: #{cnn_forward.1} parent=1 // pred_region
      _
    $region9: #{cnn_forward.1} parent=1 // pred_fallthru
      _
    // Predicated region
    $region10: #{cnn_forward.1} parent=1 // pred_check
      _
    $region11: #{cnn_forward.1} parent=1 // pred_check_branch
      %18 = sbr.rel (0) target = $region13
    $region12: #{cnn_forward.1} parent=1 // pred_region
      _
    $region13: #{cnn_forward.1} parent=1 // pred_fallthru
      _
    // Predicated region
    $region14: #{cnn_forward.1} parent=1 // pred_check
      _
    $region15: #{cnn_forward.1} parent=1 // pred_check_branch
      %20 = sbr.rel (0) target = $region17
    $region16: #{cnn_forward.1} parent=1 // pred_region
      _
    $region17: #{cnn_forward.1} parent=1 // pred_fallthru
      _
    // Predicated region
    $region18: #{cnn_forward.1} parent=1 // pred_check
      _
    $region19: #{cnn_forward.1} parent=1 // pred_check_branch
      %22 = sbr.rel (0) target = $region21
    $region20: #{cnn_forward.1} parent=1 // pred_region
      _
    $region21: #{cnn_forward.1} parent=1 // pred_fallthru
      _
    // Predicated region
    $region22: #{cnn_forward.1} parent=1 // pred_check
      _
    $region23: #{cnn_forward.1} parent=1 // pred_check_branch
      %24 = sbr.rel (0) target = $region25
    $region24: #{cnn_forward.1} parent=1 // pred_region
      _
    $region25: #{cnn_forward.1} parent=1 // pred_fallthru
      _
    // Predicated region
    $region26: #{cnn_forward.1} parent=1 // pred_check
      _
    $region27: #{cnn_forward.1} parent=1 // pred_check_branch
      %26 = sbr.rel (0) target = $region29
    $region28: #{cnn_forward.1} parent=1 // pred_region
      _
    $region29: #{cnn_forward.1} parent=1 // pred_fallthru
      _
    %v27 = vld [vmem:[%s1] sm:$0xff]
    %v28 = vld [vmem:[%s0] sm:$0xff]
    %v29 = vld [vmem:[%s0 + $0x8] sm:$0xff]
    %v30 = vld [vmem:[%s0 + $0x10] sm:$0xff]
    %v31 = vld [vmem:[%s0 + $0x18] sm:$0xff]
    %v32 = vld [vmem:[%s0 + $0x20] sm:$0xff]
    %v33 = vld [vmem:[%s0 + $0x28] sm:$0xff]
    %v34 = vld [vmem:[%s0 + $0x30] sm:$0xff]
    %v35 = vld [vmem:[%s0 + $0x38] sm:$0xff]
    %v36 = vld [vmem:[%s0 + $0x40] sm:$0xff]
    %v37 = vld [vmem:[%s0 + $0x48] sm:$0xff]
    %v38 = vld [vmem:[%s0 + $0x50] sm:$0xff]
    %v39 = vld [vmem:[%s0 + $0x58] sm:$0xff]
    %v40 = vld [vmem:[%s0 + $0x60] sm:$0xff]
    %v41 = vld [vmem:[%s0 + $0x68] sm:$0xff]
    %v42 = vld [vmem:[%s0 + $0x70] sm:$0xff]
    %v43 = vld [vmem:[%s0 + $0x78] sm:$0xff]
    %v44 = vld [vmem:[%s0 + $0x80] sm:$0xf]
    %v45 = vld [vmem:[%s0 + $0x88] sm:$0xf]
    %v46 = vld [vmem:[%s0 + $0x90] sm:$0xf]
    %v47 = vld [vmem:[%s0 + $0x98] sm:$0xf]
    %vm48 = vcmask 293888
    %v50 = vsel %vm48, %v27, 0
    %vm52 = vcmask 1043456
    %v54 = vsel %vm52, %v44, 0
    %v57 = vsel %vm52, %v45, 0
    %v60 = vsel %vm52, %v46, 0
    %v63 = vsel %vm52, %v47, 0
    %65 = vmatprep.subr.mxu0 %v29
    %66 = vmatpush1.msra.mxu0 %v28
    %67 = vmatprep.subr.mxu0 %v33
    %68 = vmatpush1.msra.mxu0 %v32
    %69 = vmatprep.subr.mxu0 %v37
    %70 = vmatpush1.msra.mxu0 %v36
    %71 = vmatprep.subr.mxu0 %v41
    %72 = vmatpush1.msra.mxu0 %v40
    %73 = vmatprep.subr.mxu0 %v57
    %74 = vmatpush1.msra.mxu0 %v54
    %75 = vmatprep.subr.mxu0 0.0
    %76 = vmatpush1.msra.mxu0 0.0
    %77 = vmatprep.subr.mxu0 0.0
    %78 = vmatpush1.msra.mxu0 0.0
    %79 = vmatprep.subr.mxu0 0.0
    %80 = vmatpush1.msra.mxu0 0.0
    %81 = vmatprep.subr.mxu0 0.0
    %82 = vmatpush1.msra.mxu0 0.0
    %83 = vmatprep.subr.mxu0 0.0
    %84 = vmatpush1.msra.mxu0 0.0
    %85 = vmatprep.subr.mxu0 0.0
    %86 = vmatpush1.msra.mxu0 0.0
    %87 = vmatprep.subr.mxu0 0.0
    %88 = vmatpush1.msra.mxu0 0.0
    %89 = vmatprep.subr.mxu0 0.0
    %90 = vmatpush1.msra.mxu0 0.0
    %91 = vmatprep.subr.mxu0 0.0
    %92 = vmatpush1.msra.mxu0 0.0
    %93 = vmatprep.subr.mxu0 0.0
    %94 = vmatpush1.msra.mxu0 0.0
    %95 = vmatprep.subr.mxu0 0.0
    %96 = vmatpush1.msra.mxu0 0.0
    %97 = vmatprep.subr.mxu0 0.0
    %98 = vmatpush1.msra.mxu0 0.0
    %99 = vmatprep.subr.mxu0 0.0
    %100 = vmatpush1.msra.mxu0 0.0
    %101 = vmatprep.subr.mxu0 0.0
    %102 = vmatpush1.msra.mxu0 0.0
    %103 = vmatprep.subr.mxu0 0.0
    %104 = vmatpush1.msra.mxu0 0.0
    %105 = vmatprep.subr.mxu0 0.0
    %106 = vmatpush1.msra.mxu0 0.0
    %107 = vmatprep.subr.mxu0 0.0
    %108 = vmatpush1.msra.mxu0 0.0
    %109 = vmatprep.subr.mxu0 0.0
    %110 = vmatpush1.msra.mxu0 0.0
    %111 = vmatprep.subr.mxu0 0.0
    %112 = vmatpush1.msra.mxu0 0.0
    %113 = vmatprep.subr.mxu0 0.0
    %114 = vmatpush1.msra.mxu0 0.0
    %115 = vmatprep.subr.mxu0 0.0
    %116 = vmatpush1.msra.mxu0 0.0
    %117 = vmatprep.subr.mxu0 0.0
    %118 = vmatpush1.msra.mxu0 0.0
    %119 = vmatprep.subr.mxu0 0.0
    %120 = vmatpush1.msra.mxu0 0.0
    %121 = vmatprep.subr.mxu0 0.0
    %122 = vmatpush1.msra.mxu0 0.0
    %123 = vmatprep.subr.mxu0 0.0
    %124 = vmatpush1.msra.mxu0 0.0
    %125 = vmatprep.subr.mxu0 0.0
    %126 = vmatpush1.msra.mxu0 0.0
    %127 = vmatprep.subr.mxu0 0.0
    %128 = vmatpush1.msra.mxu0 0.0
    %129 = vmatprep.mubr.f32.mxu0 0.0
    %130 = vmatmul.mubr.f32.gmra.mrb[0].mxu0 %v50
    %v131 = vpop.f32.mrb[0].mxu0
    %v132 = vadd.f32 0.0, %v131
    %v133 = vpop.f32.mrb[0].mxu0
    %v134 = vadd.f32 0.0, %v133
    %135 = vdwg.mxu0
    %136 = vmatprep.subr.mxu0 %v31
    %137 = vmatpush1.msra.mxu0 %v30
    %138 = vmatprep.subr.mxu0 %v35
    %139 = vmatpush1.msra.mxu0 %v34
    %140 = vmatprep.subr.mxu0 %v39
    %141 = vmatpush1.msra.mxu0 %v38
    %142 = vmatprep.subr.mxu0 %v43
    %143 = vmatpush1.msra.mxu0 %v42
    %144 = vmatprep.subr.mxu0 %v63
    %145 = vmatpush1.msra.mxu0 %v60
    %146 = vmatprep.subr.mxu0 0.0
    %147 = vmatpush1.msra.mxu0 0.0
    %148 = vmatprep.subr.mxu0 0.0
    %149 = vmatpush1.msra.mxu0 0.0
    %150 = vmatprep.subr.mxu0 0.0
    %151 = vmatpush1.msra.mxu0 0.0
    %152 = vmatprep.subr.mxu0 0.0
    %153 = vmatpush1.msra.mxu0 0.0
    %154 = vmatprep.subr.mxu0 0.0
    %155 = vmatpush1.msra.mxu0 0.0
    %156 = vmatprep.subr.mxu0 0.0
    %157 = vmatpush1.msra.mxu0 0.0
    %158 = vmatprep.subr.mxu0 0.0
    %159 = vmatpush1.msra.mxu0 0.0
    %160 = vmatprep.subr.mxu0 0.0
    %161 = vmatpush1.msra.mxu0 0.0
    %162 = vmatprep.subr.mxu0 0.0
    %163 = vmatpush1.msra.mxu0 0.0
    %164 = vmatprep.subr.mxu0 0.0
    %165 = vmatpush1.msra.mxu0 0.0
    %166 = vmatprep.subr.mxu0 0.0
    %167 = vmatpush1.msra.mxu0 0.0
    %168 = vmatprep.subr.mxu0 0.0
    %169 = vmatpush1.msra.mxu0 0.0
    %170 = vmatprep.subr.mxu0 0.0
    %171 = vmatpush1.msra.mxu0 0.0
    %172 = vmatprep.subr.mxu0 0.0
    %173 = vmatpush1.msra.mxu0 0.0
    %174 = vmatprep.subr.mxu0 0.0
    %175 = vmatpush1.msra.mxu0 0.0
    %176 = vmatprep.subr.mxu0 0.0
    %177 = vmatpush1.msra.mxu0 0.0
    %178 = vmatprep.subr.mxu0 0.0
    %179 = vmatpush1.msra.mxu0 0.0
    %180 = vmatprep.subr.mxu0 0.0
    %181 = vmatpush1.msra.mxu0 0.0
    %182 = vmatprep.subr.mxu0 0.0
    %183 = vmatpush1.msra.mxu0 0.0
    %184 = vmatprep.subr.mxu0 0.0
    %185 = vmatpush1.msra.mxu0 0.0
    %186 = vmatprep.subr.mxu0 0.0
    %187 = vmatpush1.msra.mxu0 0.0
    %188 = vmatprep.subr.mxu0 0.0
    %189 = vmatpush1.msra.mxu0 0.0
    %190 = vmatprep.subr.mxu0 0.0
    %191 = vmatpush1.msra.mxu0 0.0
    %192 = vmatprep.subr.mxu0 0.0
    %193 = vmatpush1.msra.mxu0 0.0
    %194 = vmatprep.subr.mxu0 0.0
    %195 = vmatpush1.msra.mxu0 0.0
    %196 = vmatprep.subr.mxu0 0.0
    %197 = vmatpush1.msra.mxu0 0.0
    %198 = vmatprep.subr.mxu0 0.0
    %199 = vmatpush1.msra.mxu0 0.0
    %200 = vmatprep.mubr.f32.mxu0 0.0
    %201 = vmatmul.mubr.f32.gmra.mrb[0].mxu0 %v50
    %v202 = vpop.f32.mrb[0].mxu0
    %v203 = vadd.f32 0.0, %v202
    %v204 = vpop.f32.mrb[0].mxu0
    %v205 = vadd.f32 0.0, %v204
    %206 = vdwg.mxu0
    %v207 = vmax.f32 %v132, %v134
    %v208 = vmax.f32 %v207, %v203
    %v209 = vmax.f32 %v208, %v205
    %v210 = vld [vmem:[%s2] sm:$0xff]
    %212 = vset.pattern.permute.xlu0 0
    %213 = vperm.xlu0 %212, %v210
    %v214 = vpop.permute.xlu0 %213
    %v216 = vadd.f32 %v209, %v214
    %v217 = vmax.f32 %v216, 0.0
    %v218 = vld [vmem:[%s3] sm:$0xff]
    %v219 = vld [vmem:[%s3 + $0x8] sm:$0xff]
    %v220 = vld [vmem:[%s3 + $0x10] sm:$0xff]
    %v221 = vld [vmem:[%s3 + $0x18] sm:$0xff]
    %v222 = vld [vmem:[%s3 + $0x20] sm:$0xff]
    %v223 = vld [vmem:[%s3 + $0x28] sm:$0xff]
    %v224 = vld [vmem:[%s3 + $0x30] sm:$0xff]
    %v225 = vld [vmem:[%s3 + $0x38] sm:$0xff]
    %v226 = vld [vmem:[%s4] sm:$0xff]
    %v227 = vld [vmem:[%s5] sm:$0xff]
    %v228 = vld [vmem:[%s5 + $0x8] sm:$0xff]
    %v229 = vld [vmem:[%s5 + $0x10] sm:$0xff]
    %v230 = vld [vmem:[%s5 + $0x18] sm:$0xff]
    %v231 = vld [vmem:[%s5 + $0x20] sm:$0xff]
    %v232 = vld [vmem:[%s5 + $0x28] sm:$0xff]
    %v233 = vld [vmem:[%s5 + $0x30] sm:$0xff]
    %v234 = vld [vmem:[%s5 + $0x38] sm:$0xff]
    %v235 = vld [vmem:[%s5 + $0x40] sm:$0xff]
    %v236 = vld [vmem:[%s5 + $0x48] sm:$0xff]
    %vm237 = vcmask 523264
    %v239 = vsel %vm237, %v217, 0
    %241 = vmatprep.subr.mxu0 0.0
    %242 = vmatpush1.msra.mxu0 %v218
    %243 = vmatprep.subr.mxu0 0.0
    %244 = vmatpush1.msra.mxu0 %v219
    %245 = vmatprep.subr.mxu0 0.0
    %246 = vmatpush1.msra.mxu0 %v220
    %247 = vmatprep.subr.mxu0 0.0
    %248 = vmatpush1.msra.mxu0 %v221
    %249 = vmatprep.subr.mxu0 0.0
    %250 = vmatpush1.msra.mxu0 %v222
    %251 = vmatprep.subr.mxu0 0.0
    %252 = vmatpush1.msra.mxu0 %v223
    %253 = vmatprep.subr.mxu0 0.0
    %254 = vmatpush1.msra.mxu0 %v224
    %255 = vmatprep.subr.mxu0 0.0
    %256 = vmatpush1.msra.mxu0 %v225
    %257 = vmatprep.subr.mxu0 0.0
    %258 = vmatpush1.msra.mxu0 0.0
    %259 = vmatprep.subr.mxu0 0.0
    %260 = vmatpush1.msra.mxu0 0.0
    %261 = vmatprep.subr.mxu0 0.0
    %262 = vmatpush1.msra.mxu0 0.0
    %263 = vmatprep.subr.mxu0 0.0
    %264 = vmatpush1.msra.mxu0 0.0
    %265 = vmatprep.subr.mxu0 0.0
    %266 = vmatpush1.msra.mxu0 0.0
    %267 = vmatprep.subr.mxu0 0.0
    %268 = vmatpush1.msra.mxu0 0.0
    %269 = vmatprep.subr.mxu0 0.0
    %270 = vmatpush1.msra.mxu0 0.0
    %271 = vmatprep.subr.mxu0 0.0
    %272 = vmatpush1.msra.mxu0 0.0
    %273 = vmatprep.subr.mxu0 0.0
    %274 = vmatpush1.msra.mxu0 0.0
    %275 = vmatprep.subr.mxu0 0.0
    %276 = vmatpush1.msra.mxu0 0.0
    %277 = vmatprep.subr.mxu0 0.0
    %278 = vmatpush1.msra.mxu0 0.0
    %279 = vmatprep.subr.mxu0 0.0
    %280 = vmatpush1.msra.mxu0 0.0
    %281 = vmatprep.subr.mxu0 0.0
    %282 = vmatpush1.msra.mxu0 0.0
    %283 = vmatprep.subr.mxu0 0.0
    %284 = vmatpush1.msra.mxu0 0.0
    %285 = vmatprep.subr.mxu0 0.0
    %286 = vmatpush1.msra.mxu0 0.0
    %287 = vmatprep.subr.mxu0 0.0
    %288 = vmatpush1.msra.mxu0 0.0
    %289 = vmatprep.subr.mxu0 0.0
    %290 = vmatpush1.msra.mxu0 0.0
    %291 = vmatprep.subr.mxu0 0.0
    %292 = vmatpush1.msra.mxu0 0.0
    %293 = vmatprep.subr.mxu0 0.0
    %294 = vmatpush1.msra.mxu0 0.0
    %295 = vmatprep.subr.mxu0 0.0
    %296 = vmatpush1.msra.mxu0 0.0
    %297 = vmatprep.subr.mxu0 0.0
    %298 = vmatpush1.msra.mxu0 0.0
    %299 = vmatprep.subr.mxu0 0.0
    %300 = vmatpush1.msra.mxu0 0.0
    %301 = vmatprep.subr.mxu0 0.0
    %302 = vmatpush1.msra.mxu0 0.0
    %303 = vmatprep.subr.mxu0 0.0
    %304 = vmatpush1.msra.mxu0 0.0
    %305 = vmatprep.mubr.f32.mxu0 0.0
    %306 = vmatmul.mubr.f32.gmra.mrb[0].mxu0 %v239
    %v307 = vpop.f32.mrb[0].mxu0
    %v308 = vadd.f32 0.0, %v307
    %v309 = vpop.f32.mrb[0].mxu0
    %310 = vdwg.mxu0
    %v311 = vmul.f32 %v308, %v226
    %vm312 = vcmask 654336
    %v313 = vsel %vm312, %v311, 0.0
    %v314 = vrot.slane %v313, 4
    %v315 = vadd.f32 %v313, %v314
    %v316 = vrot.slane %v315, 2
    %v317 = vadd.f32 %v315, %v316
    %v318 = vrot.slane %v317, 1
    %v319 = vadd.f32 %v317, %v318
    %v321 = vsel %vm312, %v319, 0
    %323 = vmatprep.subr.mxu0 0.0
    %324 = vmatpush1.msra.mxu0 %v227
    %325 = vmatprep.subr.mxu0 0.0
    %326 = vmatpush1.msra.mxu0 %v228
    %327 = vmatprep.subr.mxu0 0.0
    %328 = vmatpush1.msra.mxu0 %v229
    %329 = vmatprep.subr.mxu0 0.0
    %330 = vmatpush1.msra.mxu0 %v230
    %331 = vmatprep.subr.mxu0 0.0
    %332 = vmatpush1.msra.mxu0 %v231
    %333 = vmatprep.subr.mxu0 0.0
    %334 = vmatpush1.msra.mxu0 %v232
    %335 = vmatprep.subr.mxu0 0.0
    %336 = vmatpush1.msra.mxu0 %v233
    %337 = vmatprep.subr.mxu0 0.0
    %338 = vmatpush1.msra.mxu0 %v234
    %339 = vmatprep.subr.mxu0 0.0
    %340 = vmatpush1.msra.mxu0 %v235
    %341 = vmatprep.subr.mxu0 0.0
    %342 = vmatpush1.msra.mxu0 %v236
    %343 = vmatprep.subr.mxu0 0.0
    %344 = vmatpush1.msra.mxu0 0.0
    %345 = vmatprep.subr.mxu0 0.0
    %346 = vmatpush1.msra.mxu0 0.0
    %347 = vmatprep.subr.mxu0 0.0
    %348 = vmatpush1.msra.mxu0 0.0
    %349 = vmatprep.subr.mxu0 0.0
    %350 = vmatpush1.msra.mxu0 0.0
    %351 = vmatprep.subr.mxu0 0.0
    %352 = vmatpush1.msra.mxu0 0.0
    %353 = vmatprep.subr.mxu0 0.0
    %354 = vmatpush1.msra.mxu0 0.0
    %355 = vmatprep.subr.mxu0 0.0
    %356 = vmatpush1.msra.mxu0 0.0
    %357 = vmatprep.subr.mxu0 0.0
    %358 = vmatpush1.msra.mxu0 0.0
    %359 = vmatprep.subr.mxu0 0.0
    %360 = vmatpush1.msra.mxu0 0.0
    %361 = vmatprep.subr.mxu0 0.0
    %362 = vmatpush1.msra.mxu0 0.0
    %363 = vmatprep.subr.mxu0 0.0
    %364 = vmatpush1.msra.mxu0 0.0
    %365 = vmatprep.subr.mxu0 0.0
    %366 = vmatpush1.msra.mxu0 0.0
    %367 = vmatprep.subr.mxu0 0.0
    %368 = vmatpush1.msra.mxu0 0.0
    %369 = vmatprep.subr.mxu0 0.0
    %370 = vmatpush1.msra.mxu0 0.0
    %371 = vmatprep.subr.mxu0 0.0
    %372 = vmatpush1.msra.mxu0 0.0
    %373 = vmatprep.subr.mxu0 0.0
    %374 = vmatpush1.msra.mxu0 0.0
    %375 = vmatprep.subr.mxu0 0.0
    %376 = vmatpush1.msra.mxu0 0.0
    %377 = vmatprep.subr.mxu0 0.0
    %378 = vmatpush1.msra.mxu0 0.0
    %379 = vmatprep.subr.mxu0 0.0
    %380 = vmatpush1.msra.mxu0 0.0
    %381 = vmatprep.subr.mxu0 0.0
    %382 = vmatpush1.msra.mxu0 0.0
    %383 = vmatprep.subr.mxu0 0.0
    %384 = vmatpush1.msra.mxu0 0.0
    %385 = vmatprep.subr.mxu0 0.0
    %386 = vmatpush1.msra.mxu0 0.0
    %387 = vmatprep.mubr.f32.mxu0 0.0
    %388 = vmatmul.mubr.f32.gmra.mrb[0].mxu0 %v321
    %v389 = vpop.f32.mrb[0].mxu0
    %v390 = vadd.f32 0.0, %v389
    %v391 = vpop.f32.mrb[0].mxu0
    %392 = vdwg.mxu0
    %393 = vrot.lane.b32.xlu0 %v217, 64
    %v394 = vpop.permute.xlu0 %393
    %v395 = vsel %vm237, %v394, 0
    %397 = vmatprep.subr.mxu0 0.0
    %398 = vmatpush1.msra.mxu0 %v218
    %399 = vmatprep.subr.mxu0 0.0
    %400 = vmatpush1.msra.mxu0 %v219
    %401 = vmatprep.subr.mxu0 0.0
    %402 = vmatpush1.msra.mxu0 %v220
    %403 = vmatprep.subr.mxu0 0.0
    %404 = vmatpush1.msra.mxu0 %v221
    %405 = vmatprep.subr.mxu0 0.0
    %406 = vmatpush1.msra.mxu0 %v222
    %407 = vmatprep.subr.mxu0 0.0
    %408 = vmatpush1.msra.mxu0 %v223
    %409 = vmatprep.subr.mxu0 0.0
    %410 = vmatpush1.msra.mxu0 %v224
    %411 = vmatprep.subr.mxu0 0.0
    %412 = vmatpush1.msra.mxu0 %v225
    %413 = vmatprep.subr.mxu0 0.0
    %414 = vmatpush1.msra.mxu0 0.0
    %415 = vmatprep.subr.mxu0 0.0
    %416 = vmatpush1.msra.mxu0 0.0
    %417 = vmatprep.subr.mxu0 0.0
    %418 = vmatpush1.msra.mxu0 0.0
    %419 = vmatprep.subr.mxu0 0.0
    %420 = vmatpush1.msra.mxu0 0.0
    %421 = vmatprep.subr.mxu0 0.0
    %422 = vmatpush1.msra.mxu0 0.0
    %423 = vmatprep.subr.mxu0 0.0
    %424 = vmatpush1.msra.mxu0 0.0
    %425 = vmatprep.subr.mxu0 0.0
    %426 = vmatpush1.msra.mxu0 0.0
    %427 = vmatprep.subr.mxu0 0.0
    %428 = vmatpush1.msra.mxu0 0.0
    %429 = vmatprep.subr.mxu0 0.0
    %430 = vmatpush1.msra.mxu0 0.0
    %431 = vmatprep.subr.mxu0 0.0
    %432 = vmatpush1.msra.mxu0 0.0
    %433 = vmatprep.subr.mxu0 0.0
    %434 = vmatpush1.msra.mxu0 0.0
    %435 = vmatprep.subr.mxu0 0.0
    %436 = vmatpush1.msra.mxu0 0.0
    %437 = vmatprep.subr.mxu0 0.0
    %438 = vmatpush1.msra.mxu0 0.0
    %439 = vmatprep.subr.mxu0 0.0
    %440 = vmatpush1.msra.mxu0 0.0
    %441 = vmatprep.subr.mxu0 0.0
    %442 = vmatpush1.msra.mxu0 0.0
    %443 = vmatprep.subr.mxu0 0.0
    %444 = vmatpush1.msra.mxu0 0.0
    %445 = vmatprep.subr.mxu0 0.0
    %446 = vmatpush1.msra.mxu0 0.0
    %447 = vmatprep.subr.mxu0 0.0
    %448 = vmatpush1.msra.mxu0 0.0
    %449 = vmatprep.subr.mxu0 0.0
    %450 = vmatpush1.msra.mxu0 0.0
    %451 = vmatprep.subr.mxu0 0.0
    %452 = vmatpush1.msra.mxu0 0.0
    %453 = vmatprep.subr.mxu0 0.0
    %454 = vmatpush1.msra.mxu0 0.0
    %455 = vmatprep.subr.mxu0 0.0
    %456 = vmatpush1.msra.mxu0 0.0
    %457 = vmatprep.subr.mxu0 0.0
    %458 = vmatpush1.msra.mxu0 0.0
    %459 = vmatprep.subr.mxu0 0.0
    %460 = vmatpush1.msra.mxu0 0.0
    %461 = vmatprep.mubr.f32.mxu0 0.0
    %462 = vmatmul.mubr.f32.gmra.mrb[0].mxu0 %v395
    %v463 = vpop.f32.mrb[0].mxu0
    %v464 = vadd.f32 0.0, %v463
    %v465 = vpop.f32.mrb[0].mxu0
    %466 = vdwg.mxu0
    %v467 = vmul.f32 %v464, %v226
    %v468 = vsel %vm312, %v467, 0.0
    %v469 = vrot.slane %v468, 4
    %v470 = vadd.f32 %v468, %v469
    %v471 = vrot.slane %v470, 2
    %v472 = vadd.f32 %v470, %v471
    %v473 = vrot.slane %v472, 1
    %v474 = vadd.f32 %v472, %v473
    %v476 = vsel %vm312, %v474, 0
    %478 = vmatprep.subr.mxu0 0.0
    %479 = vmatpush1.msra.mxu0 %v227
    %480 = vmatprep.subr.mxu0 0.0
    %481 = vmatpush1.msra.mxu0 %v228
    %482 = vmatprep.subr.mxu0 0.0
    %483 = vmatpush1.msra.mxu0 %v229
    %484 = vmatprep.subr.mxu0 0.0
    %485 = vmatpush1.msra.mxu0 %v230
    %486 = vmatprep.subr.mxu0 0.0
    %487 = vmatpush1.msra.mxu0 %v231
    %488 = vmatprep.subr.mxu0 0.0
    %489 = vmatpush1.msra.mxu0 %v232
    %490 = vmatprep.subr.mxu0 0.0
    %491 = vmatpush1.msra.mxu0 %v233
    %492 = vmatprep.subr.mxu0 0.0
    %493 = vmatpush1.msra.mxu0 %v234
    %494 = vmatprep.subr.mxu0 0.0
    %495 = vmatpush1.msra.mxu0 %v235
    %496 = vmatprep.subr.mxu0 0.0
    %497 = vmatpush1.msra.mxu0 %v236
    %498 = vmatprep.subr.mxu0 0.0
    %499 = vmatpush1.msra.mxu0 0.0
    %500 = vmatprep.subr.mxu0 0.0
    %501 = vmatpush1.msra.mxu0 0.0
    %502 = vmatprep.subr.mxu0 0.0
    %503 = vmatpush1.msra.mxu0 0.0
    %504 = vmatprep.subr.mxu0 0.0
    %505 = vmatpush1.msra.mxu0 0.0
    %506 = vmatprep.subr.mxu0 0.0
    %507 = vmatpush1.msra.mxu0 0.0
    %508 = vmatprep.subr.mxu0 0.0
    %509 = vmatpush1.msra.mxu0 0.0
    %510 = vmatprep.subr.mxu0 0.0
    %511 = vmatpush1.msra.mxu0 0.0
    %512 = vmatprep.subr.mxu0 0.0
    %513 = vmatpush1.msra.mxu0 0.0
    %514 = vmatprep.subr.mxu0 0.0
    %515 = vmatpush1.msra.mxu0 0.0
    %516 = vmatprep.subr.mxu0 0.0
    %517 = vmatpush1.msra.mxu0 0.0
    %518 = vmatprep.subr.mxu0 0.0
    %519 = vmatpush1.msra.mxu0 0.0
    %520 = vmatprep.subr.mxu0 0.0
    %521 = vmatpush1.msra.mxu0 0.0
    %522 = vmatprep.subr.mxu0 0.0
    %523 = vmatpush1.msra.mxu0 0.0
    %524 = vmatprep.subr.mxu0 0.0
    %525 = vmatpush1.msra.mxu0 0.0
    %526 = vmatprep.subr.mxu0 0.0
    %527 = vmatpush1.msra.mxu0 0.0
    %528 = vmatprep.subr.mxu0 0.0
    %529 = vmatpush1.msra.mxu0 0.0
    %530 = vmatprep.subr.mxu0 0.0
    %531 = vmatpush1.msra.mxu0 0.0
    %532 = vmatprep.subr.mxu0 0.0
    %533 = vmatpush1.msra.mxu0 0.0
    %534 = vmatprep.subr.mxu0 0.0
    %535 = vmatpush1.msra.mxu0 0.0
    %536 = vmatprep.subr.mxu0 0.0
    %537 = vmatpush1.msra.mxu0 0.0
    %538 = vmatprep.subr.mxu0 0.0
    %539 = vmatpush1.msra.mxu0 0.0
    %540 = vmatprep.subr.mxu0 0.0
    %541 = vmatpush1.msra.mxu0 0.0
    %542 = vmatprep.mubr.f32.mxu0 0.0
    %543 = vmatmul.mubr.f32.gmra.mrb[0].mxu0 %v476
    %v544 = vpop.f32.mrb[0].mxu0
    %v545 = vadd.f32 0.0, %v544
    %v546 = vpop.f32.mrb[0].mxu0
    %547 = vdwg.mxu0
    %v549 = vrot.slane %v545, 7
    %vm551 = vcmask 1040384
    %v552 = vsel %vm551, %v390, %v549
    %v553 = vld [vmem:[%s6] sm:$0x1]
    %v555 = vlaneseq
    %v556 = vshrl.u32 %v555, 7
    %v557 = vsub.s32 0, %v556
    %v558 = vrot.slane %v553, %v557
    %v560 = vadd.f32 %v552, %v558
    %vm561 = vcmask 74752
    %562 = vst.msk [vmem:[#allocation2] sm:$0x3] %vm561, %v560
    // Predicated region
    $region30: #{cnn_forward.1} parent=1 // pred_check
      _
    $region31: #{cnn_forward.1} parent=1 // pred_check_branch
      %564 = sbr.rel (0) target = $region33
    $region32: #{cnn_forward.1} parent=1 // pred_region
      %s566 = ssub.s32 32, 32
      %567 = vsyncadd [#allocation3], %s566
      %s569 = sshll.u32 [#allocation2], 4
      %s570 = int_to_ptr.vmem [resolvable:$true] %s569
      %572 = dma.vmem_to_hbm [thread:$0]  %s570, 32, %s7, [#allocation3]
    $region33: #{cnn_forward.1} parent=1 // pred_fallthru
      _
    // Predicated region
    $region34: #{cnn_forward.1} parent=1 // pred_check
      _
    $region35: #{cnn_forward.1} parent=1 // pred_check_branch
      %574 = sbr.rel (0) target = $region37
    $region36: #{cnn_forward.1} parent=1 // pred_region
      %575 = dma.done [#allocation3], 32
    $region37: #{cnn_forward.1} parent=1 // pred_fallthru
      _
    %576 = vsyncpa [#allocation3], 1

</llo_original>
